<compile_context>
chip_gen: v5e
topology: v5e:2x2
jax: 0.10.0
libtpu: 0.0.40
codegen_flags: <defaults>
</compile_context>

<pallas_src>
from collections import defaultdict
from functools import lru_cache

import numpy as np
import jax
import jax.numpy as jnp
from jax.experimental import pallas as pl
from jax.experimental.pallas import tpu as pltpu

LANE = 128

# packed-input row layout
ROW_COORD = 0    # rows 0..2  : coords / spatial_size
ROW_MARGIN = 3   # row  3     : margins
ROW_EMB = 4      # rows 4..6  : embeddings
ROW_SEED = 7     # row  7     : seediness
ROW_LABEL = 8    # row  8     : dense cluster id (float; -1.0 = padded point)
N_ROWS = 9


def _next_pow2(x):
    x = int(x)
    return 1 if x <= 1 else 1 << (x - 1).bit_length()


def _make_group_kernel(c_pad, n_pad):
    """Kernel processing ONE (gpu, batch, semantic-class) point group per grid
    step.  All clusters of the group are handled at once (packed along
    sublanes of the (c_pad, n_pad) working tiles)."""

    def kernel(packed_ref, out_ref):
        packed = packed_ref[0]                                   # (9, Np) f32

        labels = packed[ROW_LABEL:ROW_LABEL + 1, :].astype(jnp.int32)   # (1, Np)
        margins = packed[ROW_MARGIN:ROW_MARGIN + 1, :]                  # (1, Np)
        seed = packed[ROW_SEED:ROW_SEED + 1, :]                         # (1, Np)
        ex = packed[ROW_EMB + 0:ROW_EMB + 1, :]                         # (1, Np)
        ey = packed[ROW_EMB + 1:ROW_EMB + 2, :]
        ez = packed[ROW_EMB + 2:ROW_EMB + 3, :]

        valid = (labels >= 0).astype(jnp.float32)                       # (1, Np)
        cid = jax.lax.broadcasted_iota(jnp.int32, (c_pad, n_pad), 0)    # row = cluster id
        cmask = (cid == labels).astype(jnp.float32)                     # (Cp, Np) one-hot

        n_valid = jnp.sum(valid)
        inv_nvalid = 1.0 / jnp.maximum(n_valid, 1.0)

        counts = jnp.sum(cmask, axis=1, keepdims=True)                  # (Cp, 1)
        cvalid = (counts > 0.5).astype(jnp.float32)                     # real clusters
        n_clusters = jnp.sum(cvalid)
        inv_nclusters = 1.0 / jnp.maximum(n_clusters, 1.0)
        inv_counts = 1.0 / jnp.maximum(counts, 1.0)                     # tiny -> exact divide

        # Per-cluster sums of [x, y, z, margin] in one MXU contraction over points.
        sums = jnp.einsum('cn,fn->cf', cmask, packed[ROW_COORD:ROW_MARGIN + 1, :],
                          preferred_element_type=jnp.float32)           # (Cp, 4)
        cx = sums[:, 0:1] * inv_counts                                  # coord centroid (Cp,1)
        cy = sums[:, 1:2] * inv_counts
        cz = sums[:, 2:3] * inv_counts
        sigma = sums[:, 3:4] * inv_counts                               # mean margin (Cp,1)

        # Squared distance embedding -> (fixed coord) centroid for every (cluster, point).
        e_sq = ex * ex + ey * ey + ez * ez                              # (1, Np)
        mu_sq = cx * cx + cy * cy + cz * cz                             # (Cp, 1)
        cross = cx * ex + cy * ey + cz * ez                             # (Cp, Np)
        dists = jnp.maximum(e_sq - 2.0 * cross + mu_sq, 0.0)            # (Cp, Np)

        sigma_safe = jnp.where(cvalid > 0.0, sigma, 1.0)                # guard padded clusters
        inv_two_sig_sq = 1.0 / jnp.maximum(2.0 * sigma_safe * sigma_safe, 1e-12)  # (Cp,1)
        p = jnp.exp(-dists * inv_two_sig_sq)                            # (Cp, Np), in [0, 1]

        pc = p * cmask                                                  # reused twice
        # probs[i] = p[cluster(i), i] (each valid point lies in exactly one cluster)
        probs = jnp.sum(pc, axis=0, keepdims=True)                      # (1, Np)

        # StableBCELoss(p, mask) with p >= 0:  p - p*target + log(1 + exp(-p)),
        # mean over the class's points, averaged over real clusters.
        bce_elem = p - pc + jnp.log(1.0 + jnp.exp(-p))                  # (Cp, Np)
        bce_pc = jnp.sum(bce_elem * valid, axis=1, keepdims=True) * inv_nvalid
        mask_loss = jnp.sum(bce_pc * cvalid) * inv_nclusters

        # accuracy: 100 * per-point agreement of (p > 0.5) with the cluster mask
        # (iou_binary on 1-D tensors with per_image=True degenerates to this).
        pred = (p > 0.5).astype(jnp.float32)
        agree = (pred == cmask).astype(jnp.float32)
        acc_pc = jnp.sum(agree * valid, axis=1, keepdims=True) * (100.0 * inv_nvalid)
        acc_mean = jnp.sum(acc_pc * cvalid) * inv_nclusters

        # smoothing: sum over each cluster's points of (margin - sigma)^2 / n_clusters
        dm = margins - sigma                                            # (Cp, Np)
        smoothing_loss = jnp.sum(cmask * dm * dm) * inv_nclusters

        # seediness MSE against the (detached) probabilities
        d = probs - seed
        seed_loss = jnp.sum(d * d * valid) * inv_nvalid

        # pack 4 scalars into sublanes 0..3 of the (8, 128) output tile (lane-dense store)
        row = jax.lax.broadcasted_iota(jnp.int32, (8, LANE), 0)
        res = jnp.where(row == 0, mask_loss, 0.0)
        res = jnp.where(row == 1, smoothing_loss, res)
        res = jnp.where(row == 2, acc_mean, res)
        res = jnp.where(row == 3, seed_loss, res)
        out_ref[0] = res

    return kernel


@lru_cache(maxsize=None)
def _build_call(g_pad, c_pad, n_pad):
    kernel = _make_group_kernel(c_pad, n_pad)
    grid_spec = pltpu.PrefetchScalarGridSpec(
        num_scalar_prefetch=0,
        grid=(g_pad,),
        in_specs=[
            # single packed slab per group: one input DMA per grid step
            pl.BlockSpec((1, N_ROWS, n_pad), lambda g: (g, 0, 0)),
        ],
        out_specs=pl.BlockSpec((1, 8, LANE), lambda g: (g, 0, 0)),
    )
    call = pl.pallas_call(
        kernel,
        out_shape=jax.ShapeDtypeStruct((g_pad, 8, LANE), jnp.float32),
        grid_spec=grid_spec,
        # every group is independent -> parallel axis (v7x: split across TensorCores)
        compiler_params=pltpu.CompilerParams(dimension_semantics=("parallel",)),
    )
    return jax.jit(call)


class MaskBCELossPallas:
    """JAX/Pallas port of MaskBCELoss.forward (loss_scheme='BCE')."""

    def __init__(self, cfg, name='clustering_loss'):
        lc = cfg['modules'][name]
        self.seediness_weight = lc.get('seediness_weight', 1.0)
        self.embedding_weight = lc.get('embedding_weight', 10.0)
        self.smoothing_weight = lc.get('smoothing_weight', 1.0)
        self.spatial_size = lc.get('spatial_size', 512)

    def forward(self, out, segment_label, group_label):
        num_gpus = len(segment_label)

        # ---- collect every (gpu, batch, semantic-class) point group (host glue) ----
        groups = []
        for i in range(num_gpus):
            seg = np.asarray(segment_label[i])
            grp = np.asarray(group_label[i])
            slabels = seg[:, -1].astype(np.int32)
            coords = np.asarray(seg[:, :3], np.float32) / float(self.spatial_size)
            clabels = grp[:, -2].astype(np.int32)
            batch_idx = seg[:, 3].astype(np.int32)
            embedding = np.asarray(out['embeddings'][i], np.float32)
            seediness = np.asarray(out['seediness'][i], np.float32)
            margins = np.asarray(out['margins'][i], np.float32)

            for bidx in np.unique(batch_idx):
                bmask = batch_idx == bidx
                for sc in np.unique(slabels[bmask]):
                    idx = np.where(bmask & (slabels == sc))[0]
                    groups.append(dict(
                        gpu=int(i), bidx=int(bidx), sc=int(sc),
                        emb=embedding[idx], marg=margins[idx], seed=seediness[idx],
                        coords=coords[idx], clab=clabels[idx]))

        if not groups:
            return {}

        # ---- pad/bucket shapes and pack everything into ONE pallas_call ----
        num_groups = len(groups)
        max_n = max(g['emb'].shape[0] for g in groups)
        max_c = max(len(np.unique(g['clab'])) for g in groups)
        n_pad = max(LANE, _next_pow2(max_n))
        c_pad = max(8, _next_pow2(max_c))
        g_pad = _next_pow2(num_groups)

        packed_np = np.zeros((g_pad, N_ROWS, n_pad), np.float32)
        packed_np[:, ROW_LABEL, :] = -1.0          # -1 = padded point
        for g, gd in enumerate(groups):
            n = gd['emb'].shape[0]
            uniq = np.unique(gd['clab'])
            packed_np[g, ROW_COORD:ROW_COORD + 3, :n] = gd['coords'].T
            packed_np[g, ROW_MARGIN, :n] = gd['marg'].reshape(-1)
            packed_np[g, ROW_EMB:ROW_EMB + 3, :n] = gd['emb'].T
            packed_np[g, ROW_SEED, :n] = gd['seed'].reshape(-1)
            # densify cluster ids (small ints -> exact in f32)
            packed_np[g, ROW_LABEL, :n] = np.searchsorted(uniq, gd['clab']).astype(np.float32)

        call = _build_call(g_pad, c_pad, n_pad)
        scalars = call(jnp.asarray(packed_np))
        scalars = np.asarray(jax.block_until_ready(scalars))   # single device sync

        # ---- reproduce the original per-(gpu, batch) aggregation ----
        loss = defaultdict(list)
        accuracy = defaultdict(list)
        per_gb = defaultdict(list)
        for g, gd in enumerate(groups):
            per_gb[(gd['gpu'], gd['bidx'])].append((gd['sc'], scalars[g]))

        for (_i, _bidx), entries in per_gb.items():
            loss_class = defaultdict(list)
            acc_class = {}
            for sc, s in entries:
                mask_loss = float(s[0, 0])
                smoothing_loss = float(s[1, 0])
                acc = float(s[2, 0])
                seed_loss = float(s[3, 0])
                total = (self.embedding_weight * mask_loss
                         + self.seediness_weight * seed_loss
                         + self.smoothing_weight * smoothing_loss)
                loss_class['loss'].append(total)
                loss_class['mask_loss'].append(self.embedding_weight * mask_loss)
                loss_class['seed_loss'].append(self.seediness_weight * seed_loss)
                loss_class['smoothing_loss'].append(self.smoothing_weight * smoothing_loss)
                loss_class['mask_loss_{}'.format(sc)].append(mask_loss)
                loss_class['seed_loss_{}'.format(sc)].append(seed_loss)
                acc_class['accuracy_{}'.format(sc)] = acc

            for key, val in loss_class.items():
                loss[key].append(sum(val) / len(val))
            for s_key, a in acc_class.items():
                accuracy[s_key].append(a)
            accuracy['accuracy'].append(sum(acc_class.values()) / len(acc_class.values()))

        loss_avg = {k: sum(v) / len(v) for k, v in loss.items()}
        acc_avg = {k: sum(v) / len(v) for k, v in accuracy.items()}
        res = {}
        res.update(loss_avg)
        res.update(acc_avg)
        return res


if __name__ == "__main__":
    cfg = {'modules': {'clustering_loss': {
        'seediness_weight': 1.0,
        'embedding_weight': 10.0,
        'smoothing_weight': 1.0,
        'spatial_size': 16,
        'loss_scheme': 'BCE',
    }}}
    criterion = MaskBCELossPallas(cfg)

    # Synthetic deterministic inputs (no learned parameters in this module).
    key = jax.random.PRNGKey(0)
    k_coords, k_emb, k_marg, k_seed = jax.random.split(key, 4)
    N = 96   # 2 batches x 2 semantic classes x 2 clusters x 12 points

    batch_idx = np.repeat([0, 1], 48).astype(np.float32)
    slabels = np.tile(np.repeat([0, 1], 24), 2).astype(np.float32)
    clabels = np.repeat(np.arange(8), 12).astype(np.float32)

    coords_np = np.asarray(jax.random.uniform(k_coords, (N, 3), jnp.float32)) * 16.0
    segment_label = [np.concatenate(
        [coords_np, batch_idx[:, None], slabels[:, None]], axis=1).astype(np.float32)]
    group_label = [np.concatenate(
        [coords_np, clabels[:, None], batch_idx[:, None]], axis=1).astype(np.float32)]

    out = {
        'embeddings': [np.asarray(jax.random.uniform(k_emb, (N, 3), jnp.float32))],
        'margins': [np.asarray(jax.random.uniform(k_marg, (N, 1), jnp.float32,
                                                  minval=0.2, maxval=0.8))],
        'seediness': [np.asarray(jax.random.uniform(k_seed, (N, 1), jnp.float32))],
    }

    res = criterion.forward(out, segment_label, group_label)
    vals = jax.block_until_ready(jnp.asarray([res[k] for k in sorted(res)]))
    assert bool(jnp.all(jnp.isfinite(vals))), "non-finite loss values"
    print("KERNEL_OK")
</pallas_src>

<mosaic_0001>
module attributes {stable_mosaic.version = 11 : i64} {
  func.func @kernel(%arg0: i32, %arg1: memref<1x9x128xf32, #tpu.memory_space<vmem>>, %arg2: memref<1x8x128xf32, #tpu.memory_space<vmem>>) attributes {dimension_semantics = [#tpu.dimension_semantics<parallel>], iteration_bounds = array<i64: 4>, scalar_prefetch = 0 : i64, scratch_operands = 0 : i64, tpu.core_type = #tpu.core_type<tc>, window_params = [{transform_indices = @transform_0, window_bounds = array<i64: 1, 9, 128>}, {transform_indices = @transform_1, window_bounds = array<i64: 1, 8, 128>}]} {
    %c0 = arith.constant 0 : index
    %c0_0 = arith.constant 0 : index
    %c0_1 = arith.constant 0 : index
    %0 = vector.load %arg1[%c0, %c0_0, %c0_1] : memref<1x9x128xf32, #tpu.memory_space<vmem>>, vector<1x9x128xf32>
    %1 = vector.shape_cast %0 : vector<1x9x128xf32> to vector<9x128xf32>
    %2 = vector.extract_strided_slice %1 {offsets = [8, 0], sizes = [1, 128], strides = [1, 1]} : vector<9x128xf32> to vector<1x128xf32>
    %3 = arith.fptosi %2 : vector<1x128xf32> to vector<1x128xi32>
    %4 = vector.extract_strided_slice %1 {offsets = [3, 0], sizes = [1, 128], strides = [1, 1]} : vector<9x128xf32> to vector<1x128xf32>
    %5 = vector.extract_strided_slice %1 {offsets = [7, 0], sizes = [1, 128], strides = [1, 1]} : vector<9x128xf32> to vector<1x128xf32>
    %6 = vector.extract_strided_slice %1 {offsets = [4, 0], sizes = [1, 128], strides = [1, 1]} : vector<9x128xf32> to vector<1x128xf32>
    %7 = vector.extract_strided_slice %1 {offsets = [5, 0], sizes = [1, 128], strides = [1, 1]} : vector<9x128xf32> to vector<1x128xf32>
    %8 = vector.extract_strided_slice %1 {offsets = [6, 0], sizes = [1, 128], strides = [1, 1]} : vector<9x128xf32> to vector<1x128xf32>
    %c0_i32 = arith.constant 0 : i32
    %9 = vector.broadcast %c0_i32 : i32 to vector<1x128xi32>
    %10 = arith.cmpi sge, %3, %9 : vector<1x128xi32>
    %11 = arith.extui %10 : vector<1x128xi1> to vector<1x128xi32>
    %12 = arith.sitofp %11 : vector<1x128xi32> to vector<1x128xf32>
    %13 = tpu.iota {dimensions = array<i32: 0>} : vector<8x128xi32>
    %14 = vector.broadcast %3 : vector<1x128xi32> to vector<8x128xi32>
    %15 = arith.cmpi eq, %13, %14 : vector<8x128xi32>
    %16 = arith.extui %15 : vector<8x128xi1> to vector<8x128xi32>
    %17 = arith.sitofp %16 : vector<8x128xi32> to vector<8x128xf32>
    %18 = vector.shape_cast %12 : vector<1x128xf32> to vector<1x1x128xf32>
    %cst = arith.constant dense<0.000000e+00> : vector<1xf32>
    %19 = vector.multi_reduction <add>, %18, %cst [1, 2] : vector<1x1x128xf32> to vector<1xf32>
    %20 = vector.shape_cast %19 : vector<1xf32> to vector<1x1x1xf32>
    %21 = vector.extract %20[0, 0, 0] : f32 from vector<1x1x1xf32>
    %cst_2 = arith.constant 1.000000e+00 : f32
    %22 = arith.maximumf %21, %cst_2 : f32
    %cst_3 = arith.constant 1.000000e+00 : f32
    %23 = arith.divf %cst_3, %22 : f32
    %cst_4 = arith.constant dense<0.000000e+00> : vector<8xf32>
    %24 = vector.multi_reduction <add>, %17, %cst_4 [1] : vector<8x128xf32> to vector<8xf32>
    %25 = vector.shape_cast %24 : vector<8xf32> to vector<8x1xf32>
    %cst_5 = arith.constant 5.000000e-01 : f32
    %26 = vector.broadcast %cst_5 : f32 to vector<8x1xf32>
    %27 = arith.cmpf ogt, %25, %26 : vector<8x1xf32>
    %28 = arith.extui %27 : vector<8x1xi1> to vector<8x1xi32>
    %29 = arith.sitofp %28 : vector<8x1xi32> to vector<8x1xf32>
    %30 = vector.shape_cast %29 : vector<8x1xf32> to vector<1x8x1xf32>
    %cst_6 = arith.constant dense<0.000000e+00> : vector<1xf32>
    %31 = vector.multi_reduction <add>, %30, %cst_6 [1, 2] : vector<1x8x1xf32> to vector<1xf32>
    %32 = vector.shape_cast %31 : vector<1xf32> to vector<1x1x1xf32>
    %33 = vector.extract %32[0, 0, 0] : f32 from vector<1x1x1xf32>
    %cst_7 = arith.constant 1.000000e+00 : f32
    %34 = arith.maximumf %33, %cst_7 : f32
    %cst_8 = arith.constant 1.000000e+00 : f32
    %35 = arith.divf %cst_8, %34 : f32
    %cst_9 = arith.constant 1.000000e+00 : f32
    %36 = vector.broadcast %cst_9 : f32 to vector<8x1xf32>
    %37 = arith.maximumf %25, %36 : vector<8x1xf32>
    %cst_10 = arith.constant 1.000000e+00 : f32
    %38 = vector.broadcast %cst_10 : f32 to vector<8x1xf32>
    %39 = arith.divf %38, %37 : vector<8x1xf32>
    %40 = vector.extract_strided_slice %1 {offsets = [0, 0], sizes = [4, 128], strides = [1, 1]} : vector<9x128xf32> to vector<4x128xf32>
    "tpu.trace_start"() <{level = 10 : i32, message = "cn,fn->cf"}> : () -> ()
    %cst_11 = arith.constant dense<0.000000e+00> : vector<8x4xf32>
    %41 = tpu.matmul %17, %40, %cst_11 {dimension_numbers = #tpu.dot_dimension_numbers<[1], [1], [0], [0], [0, 0, 1, 0], [], []>} : vector<8x128xf32>, vector<4x128xf32>, vector<8x4xf32> -> vector<8x4xf32>
    "tpu.trace_stop"() : () -> ()
    %42 = vector.extract_strided_slice %41 {offsets = [0, 0], sizes = [8, 1], strides = [1, 1]} : vector<8x4xf32> to vector<8x1xf32>
    %43 = arith.mulf %42, %39 : vector<8x1xf32>
    %44 = vector.extract_strided_slice %41 {offsets = [0, 1], sizes = [8, 1], strides = [1, 1]} : vector<8x4xf32> to vector<8x1xf32>
    %45 = arith.mulf %44, %39 : vector<8x1xf32>
    %46 = vector.extract_strided_slice %41 {offsets = [0, 2], sizes = [8, 1], strides = [1, 1]} : vector<8x4xf32> to vector<8x1xf32>
    %47 = arith.mulf %46, %39 : vector<8x1xf32>
    %48 = vector.extract_strided_slice %41 {offsets = [0, 3], sizes = [8, 1], strides = [1, 1]} : vector<8x4xf32> to vector<8x1xf32>
    %49 = arith.mulf %48, %39 : vector<8x1xf32>
    %50 = arith.mulf %6, %6 : vector<1x128xf32>
    %51 = arith.mulf %7, %7 : vector<1x128xf32>
    %52 = arith.addf %50, %51 : vector<1x128xf32>
    %53 = arith.mulf %8, %8 : vector<1x128xf32>
    %54 = arith.addf %52, %53 : vector<1x128xf32>
    %55 = arith.mulf %43, %43 : vector<8x1xf32>
    %56 = arith.mulf %45, %45 : vector<8x1xf32>
    %57 = arith.addf %55, %56 : vector<8x1xf32>
    %58 = arith.mulf %47, %47 : vector<8x1xf32>
    %59 = arith.addf %57, %58 : vector<8x1xf32>
    %60 = vector.broadcast %43 : vector<8x1xf32> to vector<8x128xf32>
    %61 = vector.broadcast %6 : vector<1x128xf32> to vector<8x128xf32>
    %62 = arith.mulf %60, %61 : vector<8x128xf32>
    %63 = vector.broadcast %45 : vector<8x1xf32> to vector<8x128xf32>
    %64 = vector.broadcast %7 : vector<1x128xf32> to vector<8x128xf32>
    %65 = arith.mulf %63, %64 : vector<8x128xf32>
    %66 = arith.addf %62, %65 : vector<8x128xf32>
    %67 = vector.broadcast %47 : vector<8x1xf32> to vector<8x128xf32>
    %68 = vector.broadcast %8 : vector<1x128xf32> to vector<8x128xf32>
    %69 = arith.mulf %67, %68 : vector<8x128xf32>
    %70 = arith.addf %66, %69 : vector<8x128xf32>
    %cst_12 = arith.constant 2.000000e+00 : f32
    %71 = vector.broadcast %cst_12 : f32 to vector<8x128xf32>
    %72 = arith.mulf %71, %70 : vector<8x128xf32>
    %73 = vector.broadcast %54 : vector<1x128xf32> to vector<8x128xf32>
    %74 = arith.subf %73, %72 : vector<8x128xf32>
    %75 = vector.broadcast %59 : vector<8x1xf32> to vector<8x128xf32>
    %76 = arith.addf %74, %75 : vector<8x128xf32>
    %cst_13 = arith.constant 0.000000e+00 : f32
    %77 = vector.broadcast %cst_13 : f32 to vector<8x128xf32>
    %78 = arith.maximumf %76, %77 : vector<8x128xf32>
    %cst_14 = arith.constant 0.000000e+00 : f32
    %79 = vector.broadcast %cst_14 : f32 to vector<8x1xf32>
    %80 = arith.cmpf ogt, %29, %79 : vector<8x1xf32>
    %cst_15 = arith.constant 1.000000e+00 : f32
    %81 = vector.broadcast %cst_15 : f32 to vector<8x1xf32>
    %82 = arith.select %80, %49, %81 : vector<8x1xi1>, vector<8x1xf32>
    %cst_16 = arith.constant 2.000000e+00 : f32
    %83 = vector.broadcast %cst_16 : f32 to vector<8x1xf32>
    %84 = arith.mulf %83, %82 : vector<8x1xf32>
    %85 = arith.mulf %84, %82 : vector<8x1xf32>
    %cst_17 = arith.constant 9.99999996E-13 : f32
    %86 = vector.broadcast %cst_17 : f32 to vector<8x1xf32>
    %87 = arith.maximumf %85, %86 : vector<8x1xf32>
    %cst_18 = arith.constant 1.000000e+00 : f32
    %88 = vector.broadcast %cst_18 : f32 to vector<8x1xf32>
    %89 = arith.divf %88, %87 : vector<8x1xf32>
    %cst_19 = arith.constant 0.000000e+00 : f32
    %90 = vector.broadcast %cst_19 : f32 to vector<8x128xf32>
    %91 = arith.subf %90, %78 : vector<8x128xf32>
    %92 = vector.broadcast %89 : vector<8x1xf32> to vector<8x128xf32>
    %93 = arith.mulf %91, %92 : vector<8x128xf32>
    %94 = math.exp %93 : vector<8x128xf32>
    %95 = arith.mulf %94, %17 : vector<8x128xf32>
    %cst_20 = arith.constant dense<0.000000e+00> : vector<128xf32>
    %96 = vector.multi_reduction <add>, %95, %cst_20 [0] : vector<8x128xf32> to vector<128xf32>
    %97 = vector.shape_cast %96 : vector<128xf32> to vector<1x128xf32>
    %98 = arith.subf %94, %95 : vector<8x128xf32>
    %cst_21 = arith.constant 0.000000e+00 : f32
    %99 = vector.broadcast %cst_21 : f32 to vector<8x128xf32>
    %100 = arith.subf %99, %94 : vector<8x128xf32>
    %101 = math.exp %100 : vector<8x128xf32>
    %cst_22 = arith.constant 1.000000e+00 : f32
    %102 = vector.broadcast %cst_22 : f32 to vector<8x128xf32>
    %103 = arith.addf %102, %101 : vector<8x128xf32>
    %104 = math.log %103 : vector<8x128xf32>
    %105 = arith.addf %98, %104 : vector<8x128xf32>
    %106 = vector.broadcast %12 : vector<1x128xf32> to vector<8x128xf32>
    %107 = arith.mulf %105, %106 : vector<8x128xf32>
    %cst_23 = arith.constant dense<0.000000e+00> : vector<8xf32>
    %108 = vector.multi_reduction <add>, %107, %cst_23 [1] : vector<8x128xf32> to vector<8xf32>
    %109 = vector.shape_cast %108 : vector<8xf32> to vector<8x1xf32>
    %110 = vector.broadcast %23 : f32 to vector<8x1xf32>
    %111 = arith.mulf %109, %110 : vector<8x1xf32>
    %112 = arith.mulf %111, %29 : vector<8x1xf32>
    %113 = vector.shape_cast %112 : vector<8x1xf32> to vector<1x8x1xf32>
    %cst_24 = arith.constant dense<0.000000e+00> : vector<1xf32>
    %114 = vector.multi_reduction <add>, %113, %cst_24 [1, 2] : vector<1x8x1xf32> to vector<1xf32>
    %115 = vector.shape_cast %114 : vector<1xf32> to vector<1x1x1xf32>
    %116 = vector.extract %115[0, 0, 0] : f32 from vector<1x1x1xf32>
    %117 = arith.mulf %116, %35 : f32
    %cst_25 = arith.constant 5.000000e-01 : f32
    %118 = vector.broadcast %cst_25 : f32 to vector<8x128xf32>
    %119 = arith.cmpf ogt, %94, %118 : vector<8x128xf32>
    %120 = arith.extui %119 : vector<8x128xi1> to vector<8x128xi32>
    %121 = arith.sitofp %120 : vector<8x128xi32> to vector<8x128xf32>
    %122 = arith.cmpf oeq, %121, %17 : vector<8x128xf32>
    %123 = arith.extui %122 : vector<8x128xi1> to vector<8x128xi32>
    %124 = arith.sitofp %123 : vector<8x128xi32> to vector<8x128xf32>
    %125 = vector.broadcast %12 : vector<1x128xf32> to vector<8x128xf32>
    %126 = arith.mulf %124, %125 : vector<8x128xf32>
    %cst_26 = arith.constant dense<0.000000e+00> : vector<8xf32>
    %127 = vector.multi_reduction <add>, %126, %cst_26 [1] : vector<8x128xf32> to vector<8xf32>
    %128 = vector.shape_cast %127 : vector<8xf32> to vector<8x1xf32>
    %cst_27 = arith.constant 1.000000e+02 : f32
    %129 = arith.mulf %cst_27, %23 : f32
    %130 = vector.broadcast %129 : f32 to vector<8x1xf32>
    %131 = arith.mulf %128, %130 : vector<8x1xf32>
    %132 = arith.mulf %131, %29 : vector<8x1xf32>
    %133 = vector.shape_cast %132 : vector<8x1xf32> to vector<1x8x1xf32>
    %cst_28 = arith.constant dense<0.000000e+00> : vector<1xf32>
    %134 = vector.multi_reduction <add>, %133, %cst_28 [1, 2] : vector<1x8x1xf32> to vector<1xf32>
    %135 = vector.shape_cast %134 : vector<1xf32> to vector<1x1x1xf32>
    %136 = vector.extract %135[0, 0, 0] : f32 from vector<1x1x1xf32>
    %137 = arith.mulf %136, %35 : f32
    %138 = vector.broadcast %4 : vector<1x128xf32> to vector<8x128xf32>
    %139 = vector.broadcast %49 : vector<8x1xf32> to vector<8x128xf32>
    %140 = arith.subf %138, %139 : vector<8x128xf32>
    %141 = arith.mulf %17, %140 : vector<8x128xf32>
    %142 = arith.mulf %141, %140 : vector<8x128xf32>
    %143 = vector.shape_cast %142 : vector<8x128xf32> to vector<1x8x128xf32>
    %cst_29 = arith.constant dense<0.000000e+00> : vector<1xf32>
    %144 = vector.multi_reduction <add>, %143, %cst_29 [1, 2] : vector<1x8x128xf32> to vector<1xf32>
    %145 = vector.shape_cast %144 : vector<1xf32> to vector<1x1x1xf32>
    %146 = vector.extract %145[0, 0, 0] : f32 from vector<1x1x1xf32>
    %147 = arith.mulf %146, %35 : f32
    %148 = arith.subf %97, %5 : vector<1x128xf32>
    %149 = arith.mulf %148, %148 : vector<1x128xf32>
    %150 = arith.mulf %149, %12 : vector<1x128xf32>
    %151 = vector.shape_cast %150 : vector<1x128xf32> to vector<1x1x128xf32>
    %cst_30 = arith.constant dense<0.000000e+00> : vector<1xf32>
    %152 = vector.multi_reduction <add>, %151, %cst_30 [1, 2] : vector<1x1x128xf32> to vector<1xf32>
    %153 = vector.shape_cast %152 : vector<1xf32> to vector<1x1x1xf32>
    %154 = vector.extract %153[0, 0, 0] : f32 from vector<1x1x1xf32>
    %155 = arith.mulf %154, %23 : f32
    %156 = tpu.iota {dimensions = array<i32: 0>} : vector<8x128xi32>
    %c0_i32_31 = arith.constant 0 : i32
    %157 = vector.broadcast %c0_i32_31 : i32 to vector<8x128xi32>
    %158 = arith.cmpi eq, %156, %157 : vector<8x128xi32>
    %cst_32 = arith.constant 0.000000e+00 : f32
    %159 = vector.broadcast %117 : f32 to vector<8x128xf32>
    %160 = vector.broadcast %cst_32 : f32 to vector<8x128xf32>
    %161 = arith.select %158, %159, %160 : vector<8x128xi1>, vector<8x128xf32>
    %c1_i32 = arith.constant 1 : i32
    %162 = vector.broadcast %c1_i32 : i32 to vector<8x128xi32>
    %163 = arith.cmpi eq, %156, %162 : vector<8x128xi32>
    %164 = vector.broadcast %147 : f32 to vector<8x128xf32>
    %165 = arith.select %163, %164, %161 : vector<8x128xi1>, vector<8x128xf32>
    %c2_i32 = arith.constant 2 : i32
    %166 = vector.broadcast %c2_i32 : i32 to vector<8x128xi32>
    %167 = arith.cmpi eq, %156, %166 : vector<8x128xi32>
    %168 = vector.broadcast %137 : f32 to vector<8x128xf32>
    %169 = arith.select %167, %168, %165 : vector<8x128xi1>, vector<8x128xf32>
    %c3_i32 = arith.constant 3 : i32
    %170 = vector.broadcast %c3_i32 : i32 to vector<8x128xi32>
    %171 = arith.cmpi eq, %156, %170 : vector<8x128xi32>
    %172 = vector.broadcast %155 : f32 to vector<8x128xf32>
    %173 = arith.select %171, %172, %169 : vector<8x128xi1>, vector<8x128xf32>
    %c0_33 = arith.constant 0 : index
    %c0_34 = arith.constant 0 : index
    %c0_35 = arith.constant 0 : index
    %174 = vector.load %arg2[%c0_33, %c0_34, %c0_35] : memref<1x8x128xf32, #tpu.memory_space<vmem>>, vector<1x8x128xf32>
    %175 = vector.shape_cast %174 : vector<1x8x128xf32> to vector<8x128xf32>
    %176 = vector.shape_cast %173 : vector<8x128xf32> to vector<1x8x128xf32>
    tpu.vector_store %arg2[%c0_33, %c0_34, %c0_35], %176 {strides = array<i32>} : memref<1x8x128xf32, #tpu.memory_space<vmem>>, vector<1x8x128xf32>,
    return
  }
  func.func @transform_0(%arg0: i32) -> (i32, i32, i32) {
    %c0_i32 = arith.constant 0 : i32
    %c0_i32_0 = arith.constant 0 : i32
    %c0_i32_1 = arith.constant 0 : i32
    return %arg0, %c0_i32, %c0_i32_0 : i32, i32, i32
  }
  func.func @transform_1(%arg0: i32) -> (i32, i32, i32) {
    %c0_i32 = arith.constant 0 : i32
    %c0_i32_0 = arith.constant 0 : i32
    %c0_i32_1 = arith.constant 0 : i32
    return %arg0, %c0_i32, %c0_i32_0 : i32, i32, i32
  }
}

</mosaic_0001>

<llo_original>
// kernel: tpu_custom_call.1
$region0: #{tpu_custom_call.1}
  #allocation0 [shape = 'u32[]', space=smem, size = 0x4, offset = 0x4, fixed_abs, tag = 'smem constant byte address 0x4 - core index']
  #allocation1 [shape = 'u32[72,128]{1,0:T(1,128)}', space=vmem, size = 0x9000, scoped, tag = 'internal scratch']
  %s0 = inlined_call_operand.vmem [shape: f32[4,9,128], index: 0, kind: input, shape index: {}]
  %s1 = inlined_call_operand.hbm [shape: f32[4,8,128], index: 1, kind: output, shape index: {}]
  %s2 = sld [smem:[#allocation0]]
  $region37: #{tpu_custom_call.1} parent=0
    _
  %s4 = ssub.s32 1, %s2
  %s5 = scalar_select 0, %s4, %s2
  $region1: #{tpu_custom_call.1} parent=0
    #allocation2 [shape = 'u8[8192]{0}', space=vmem, size = 0x2000, scoped, tag = 'output window, operand 0']
    #allocation3 [shape = 's32[2]{0}', space=sflag, size = 0x8, scoped, tag = 'scoped memory for tpu_custom_call.1']
    %6 = vsyncpa [#allocation3], 0
    %s7 = scalar_lea.sflag [#allocation3], 1
    %8 = vsyncpa %s7, 0
    loop: start=0, step=1, limit=6
    $region2: #{tpu_custom_call.1} parent=1 // loop_pre_header
      _
    $region3: #{tpu_custom_call.1} parent=1 // loop_header
      %s10 = sphi 0, %s14
      %p11 = scmp.ge.s32.totalorder %s10, 6
      %s20 = sphi 0, %s22
      %s23 = sphi 0, %s20
      %s24 = sphi 0, %s23
      %s40 = sphi 0, %s24
      %s46 = sphi 0, %s48
      %s49 = sphi 0, %s46
      %s50 = sphi 0, %s49
      %s66 = sphi 0, %s50
    $region4: #{tpu_custom_call.1} parent=1 // loop_header_branch
      %13 = sbr.rel (%p11) target = $region8
    $region5: #{tpu_custom_call.1} parent=1 // loop_body
      %s15 = ssub.s32 %s10, 1
      %s16 = ssub.s32 %s10, 2
      %s17 = sadd.s32 %s10, 1
      %s18 = ssub.s32 %s10, %s17
      %p19 = scmp.eq.s32.totalorder %s18, 0
      %s21 = sadd.s32 %s20, 1
      %s22 = scalar_select %p19, %s20, %s21
      %p25 = pneg %p19
      %p26 = scmp.eq.s32.totalorder %s10, 3
      %p27 = por %p25, %p26
      %p28 = scmp.ne.s32.totalorder %s20, %s23
      %p29 = scmp.eq.s32.totalorder %s10, 0
      %p30 = por %p28, %p29
      %p31 = scmp.ne.s32.totalorder %s20, %s23
      %p32 = scmp.eq.s32.totalorder %s15, 3
      %p33 = por %p31, %p32
      %p34 = scmp.ne.s32.totalorder %s23, %s24
      %p35 = scmp.eq.s32.totalorder %s15, 0
      %p36 = por %p34, %p35
      %p37 = scmp.ne.s32.totalorder %s23, %s24
      %p38 = scmp.eq.s32.totalorder %s16, 3
      %p39 = por %p37, %p38
      %p41 = scmp.ne.s32.totalorder %s24, %s40
      %p42 = scmp.eq.s32.totalorder %s16, 0
      %p43 = por %p41, %p42
      %s44 = ssub.s32 %s10, %s17
      %p45 = scmp.eq.s32.totalorder %s44, 0
      %s47 = sadd.s32 %s46, 1
      %s48 = scalar_select %p45, %s46, %s47
      %p51 = pneg %p45
      %p52 = scmp.eq.s32.totalorder %s10, 3
      %p53 = por %p51, %p52
      %p54 = scmp.ne.s32.totalorder %s46, %s49
      %p55 = scmp.eq.s32.totalorder %s10, 0
      %p56 = por %p54, %p55
      %p57 = scmp.ne.s32.totalorder %s46, %s49
      %p58 = scmp.eq.s32.totalorder %s15, 3
      %p59 = por %p57, %p58
      %p60 = scmp.ne.s32.totalorder %s49, %s50
      %p61 = scmp.eq.s32.totalorder %s15, 0
      %p62 = por %p60, %p61
      %p63 = scmp.ne.s32.totalorder %s49, %s50
      %p64 = scmp.eq.s32.totalorder %s16, 3
      %p65 = por %p63, %p64
      %p67 = scmp.ne.s32.totalorder %s50, %s66
      %p68 = scmp.eq.s32.totalorder %s16, 0
      %p69 = por %p67, %p68
      %p70 = scmp.le.s32.totalorder 1, %s10
      %p71 = scmp.lt.s32.totalorder %s10, 5
      %p72 = pnand %p70, %p71
      %p73 = pneg %p72
      // Predicated region
      $region9: #{tpu_custom_call.1} parent=5 // pred_check
        _
      $region10: #{tpu_custom_call.1} parent=5 // pred_check_branch
        %75 = sbr.rel (%p72) target = $region12
      $region11: #{tpu_custom_call.1} parent=5 // pred_region
        %s76 = ssub.s32 %s10, 1
      $region12: #{tpu_custom_call.1} parent=5 // pred_fallthru
        _
      %p77 = scmp.lt.s32.totalorder %s10, 4
      // Predicated region
      $region13: #{tpu_custom_call.1} parent=5 // pred_check
        %p78 = pneg %p77
      $region14: #{tpu_custom_call.1} parent=5 // pred_check_branch
        %80 = sbr.rel (%p78) target = $region16
      $region15: #{tpu_custom_call.1} parent=5 // pred_region
        // Predicated region
        $region17: #{tpu_custom_call.1} parent=15 // pred_check
          %p81 = pneg %p30
        $region18: #{tpu_custom_call.1} parent=15 // pred_check_branch
          %83 = sbr.rel (%p81) target = $region20
        $region19: #{tpu_custom_call.1} parent=15 // pred_region
          %p84 = scmp.lt.s32.totalorder %s10, 3
          %s85 = scalar_select %p84, %s10, 3
          %s86 = smul.addr %s85, 2
          %s87 = smul.addr %s86, 8
          %s88 = scalar_lea.vmem %s0, %s87
        $region20: #{tpu_custom_call.1} parent=15 // pred_fallthru
          _
      $region16: #{tpu_custom_call.1} parent=5 // pred_fallthru
        _
      %p89 = scmp.le.s32.totalorder 1, %s10
      %p90 = scmp.lt.s32.totalorder %s10, 5
      %p91 = pnand %p89, %p90
      %p92 = pneg %p91
      // Predicated region
      $region21: #{tpu_custom_call.1} parent=5 // pred_check
        _
      $region22: #{tpu_custom_call.1} parent=5 // pred_check_branch
        %94 = sbr.rel (%p91) target = $region24
      $region23: #{tpu_custom_call.1} parent=5 // pred_region
        %s95 = ssub.s32 %s10, 1
        %p96 = scmp.lt.s32.totalorder %s15, 3
        %s97 = scalar_select %p96, %s15, 3
        %s98 = smul.addr %s97, 2
        %s99 = smul.addr %s98, 8
        %s100 = scalar_lea.vmem %s0, %s99
        %p101 = pneg %p36
        %p102 = pneg %p33
        %p103 = pneg %p62
        %p104 = pneg %p59
        %s105 = sand.u32 %s49, 1
        %s106 = scalar_lea.sflag [#allocation3], %s105
        %s107 = sand.u32 %s49, 1
        %s108 = smul.addr %s107, 8
        %s109 = scalar_lea.vmem [#allocation2], %s108
        %p110 = scmp.lt.s32.totalorder %s15, 3
        %s111 = scalar_select %p110, %s15, 3
        %s112 = smul.addr %s111, 2
        %s113 = smul.addr %s112, 8
        %s114 = scalar_lea.vmem %s0, %s113
        %v115 = vld [vmem:[%s114] sm:$0xff]
        %v116 = vld [vmem:[%s114 + $0x8] sm:$0x1]
        %v117 = vcvt.f32.s32.to.zero.pseudo %v116
        %vm118 = vcmp.ge.s32.totalorder %v117, 0
        %v119 = vsel %vm118, 1, 0
        %v120 = vcvt.s32.f32 %v119
        %v121 = vlaneseq
        %v122 = vshrl.u32 %v121, 7
        %v123 = vperm.slane %v117, 0
        %vm124 = vcmp.eq.s32.totalorder %v122, %v123
        %v125 = vsel %vm124, 1, 0
        %v126 = vcvt.s32.f32 %v125
        %vm127 = vcmask 1040384
        %v128 = vsel %vm127, %v120, 0.0
        %129 = vadd.xlane.f32.xlu0 %v128
        %v130 = vpop.xlane.xlu0 %129
        %v131 = vrot.slane %v130, 4
        %v132 = vadd.f32 %v130, %v131
        %v133 = vrot.slane %v132, 2
        %v134 = vadd.f32 %v132, %v133
        %v135 = vrot.slane %v134, 1
        %v136 = vadd.f32 %v134, %v135
        %s137 = vtos %v136
        %s138 = smax.f32 %s137, 1.0
        %v139 = vstv %s138
        %v140 = vrcp.pop %v139
        %v141 = vmul.f32 %v139, %v140
        %v142 = vsub.f32 1.0, %v141
        %v143 = vmul.f32 %v140, %v142
        %v144 = vadd.f32 %v140, %v143
        %vm145 = vweird.f32 %v139
        %vm146 = vweird.f32 %v140
        %vm147 = vmor %vm145, %vm146
        %v148 = vsel %vm147, %v140, %v144
        %v149 = vand.u32 2147483647, %v139
        %vm150 = vcmp.eq.f32.partialorder %v149, 8.507059e+37
        %v151 = vand.u32 %v139, 2147483648
        %v152 = vor.u32 1.1754944e-38, %v151
        %v153 = vsel %vm150, %v152, %v148
        %s154 = vtos %v153
        %155 = vadd.xlane.f32.xlu0 %v126
        %v156 = vpop.xlane.xlu0 %155
        %vm157 = vcmp.gt.f32.partialorder %v156, 0.5
        %v158 = vsel %vm157, 1, 0
        %v159 = vcvt.s32.f32 %v158
        %vm160 = vcmask 7168
        %v161 = vsel %vm160, %v159, 0.0
        %162 = vadd.xlane.f32.xlu0 %v161
        %v163 = vpop.xlane.xlu0 %162
        %v164 = vrot.slane %v163, 4
        %v165 = vadd.f32 %v163, %v164
        %v166 = vrot.slane %v165, 2
        %v167 = vadd.f32 %v165, %v166
        %v168 = vrot.slane %v167, 1
        %v169 = vadd.f32 %v167, %v168
        %s170 = vtos %v169
        %s171 = smax.f32 %s170, 1.0
        %v172 = vstv %s171
        %v173 = vrcp.pop %v172
        %v174 = vmul.f32 %v172, %v173
        %v175 = vsub.f32 1.0, %v174
        %v176 = vmul.f32 %v173, %v175
        %v177 = vadd.f32 %v173, %v176
        %vm178 = vweird.f32 %v172
        %vm179 = vweird.f32 %v173
        %vm180 = vmor %vm178, %vm179
        %v181 = vsel %vm180, %v173, %v177
        %v182 = vand.u32 2147483647, %v172
        %vm183 = vcmp.eq.f32.partialorder %v182, 8.507059e+37
        %v184 = vand.u32 %v172, 2147483648
        %v185 = vor.u32 1.1754944e-38, %v184
        %v186 = vsel %vm183, %v185, %v181
        %s187 = vtos %v186
        %v188 = vmax.f32 %v156, 1.0
        %v189 = vrcp.pop %v188
        %v190 = vmul.f32 %v188, %v189
        %v191 = vsub.f32 1.0, %v190
        %v192 = vmul.f32 %v189, %v191
        %v193 = vadd.f32 %v189, %v192
        %vm194 = vweird.f32 %v188
        %vm195 = vweird.f32 %v189
        %vm196 = vmor %vm194, %vm195
        %v197 = vsel %vm196, %v189, %v193
        %v198 = vand.u32 2147483647, %v188
        %vm199 = vcmp.eq.f32.partialorder %v198, 8.507059e+37
        %v200 = vand.u32 %v188, 2147483648
        %v201 = vor.u32 1.1754944e-38, %v200
        %v202 = vsel %vm199, %v201, %v197
        %v203 = vmul.f32 1.0, %v202
        %204 = vmatpush.xpose.msra.mxu0 0.0
        %205 = vmatpush.xpose.msra.mxu0 0.0
        %206 = vmatpush.xpose.msra.mxu0 0.0
        %207 = vmatpush.xpose.msra.mxu0 0.0
        %208 = vmatpush.xpose.msra.mxu0 0.0
        %209 = vmatpush.xpose.msra.mxu0 0.0
        %210 = vmatpush.xpose.msra.mxu0 0.0
        %211 = vmatpush.xpose.msra.mxu0 0.0
        %212 = vmatpush.xpose.msra.mxu0 0.0
        %213 = vmatpush.xpose.msra.mxu0 0.0
        %214 = vmatpush.xpose.msra.mxu0 0.0
        %215 = vmatpush.xpose.msra.mxu0 0.0
        %216 = vmatpush.xpose.msra.mxu0 0.0
        %217 = vmatpush.xpose.msra.mxu0 0.0
        %218 = vmatpush.xpose.msra.mxu0 0.0
        %219 = vmatpush.xpose.msra.mxu0 %v115
        %220 = vmatmul.f32.gmra.mxu0 %v126
        %v221 = vpop.f32.mrf.mxu0
        %v222 = vadd.f32 0.0, %v221
        %223 = vdwg.mxu0
        %v224 = vmul.f32 %v222, %v203
        %v225 = vmul.f32 %v115, %v115
        %v227 = vrot.slane %v225, 1
        %v229 = vadd.f32 %v225, %v227
        %v230 = vrot.slane %v225, 2
        %v232 = vadd.f32 %v229, %v230
        %v233 = vmul.f32 %v224, %v224
        %235 = vrot.lane.b32.xlu0 %v233, 127
        %v236 = vpop.permute.xlu0 %235
        %v238 = vadd.f32 %v233, %v236
        %239 = vrot.lane.b32.xlu0 %v233, 126
        %v240 = vpop.permute.xlu0 %239
        %v242 = vadd.f32 %v238, %v240
        %244 = vset.pattern.permute.xlu0 0
        %245 = vperm.xlu0 %244, %v224
        %v246 = vpop.permute.xlu0 %245
        %v248 = vperm.slane %v115, 4
        %v249 = vmul.f32 %v246, %v248
        %250 = vset.pattern.permute.xlu0 1
        %251 = vperm.xlu0 %250, %v224
        %v252 = vpop.permute.xlu0 %251
        %v254 = vperm.slane %v115, 5
        %v255 = vmul.f32 %v252, %v254
        %v256 = vadd.f32 %v249, %v255
        %257 = vset.pattern.permute.xlu0 2
        %258 = vperm.xlu0 %257, %v224
        %v259 = vpop.permute.xlu0 %258
        %v261 = vperm.slane %v115, 6
        %v262 = vmul.f32 %v259, %v261
        %v263 = vadd.f32 %v256, %v262
        %v264 = vmul.f32 %v263, 2.0
        %v265 = vperm.slane %v232, 4
        %v266 = vsub.f32 %v265, %v264
        %268 = vset.pattern.permute.xlu0 0
        %269 = vperm.xlu0 %268, %v242
        %v270 = vpop.permute.xlu0 %269
        %v272 = vadd.f32 %v266, %v270
        %v273 = vmax.f32 %v272, 0.0
        %vm274 = vcmp.gt.f32.partialorder %v159, 0.0
        %v275 = vsel %vm274, %v224, 1.0
        %v276 = vmul.f32 %v275, 2.0
        %v277 = vmul.f32 %v276, %v275
        %v278 = vmax.f32 %v277, 1e-12
        %v279 = vrcp.pop %v278
        %v280 = vmul.f32 %v278, %v279
        %v281 = vsub.f32 1.0, %v280
        %v282 = vmul.f32 %v279, %v281
        %v283 = vadd.f32 %v279, %v282
        %vm284 = vweird.f32 %v278
        %vm285 = vweird.f32 %v279
        %vm286 = vmor %vm284, %vm285
        %v287 = vsel %vm286, %v279, %v283
        %v288 = vand.u32 2147483647, %v278
        %vm289 = vcmp.eq.f32.partialorder %v288, 8.507059e+37
        %v290 = vand.u32 %v278, 2147483648
        %v291 = vor.u32 1.1754944e-38, %v290
        %v292 = vsel %vm289, %v291, %v287
        %v293 = vmul.f32 1.0, %v292
        %v294 = vsub.f32 0.0, %v273
        %296 = vset.pattern.permute.xlu0 3
        %297 = vperm.xlu0 %296, %v293
        %v298 = vpop.permute.xlu0 %297
        %v300 = vmul.f32 %v294, %v298
        %v301 = vmul.f32 %v300, 1.442695
        %v302 = vpow.pop %v301
        %v303 = vmul.f32 %v302, %v126
        %v304 = vrot.slane %v303, 4
        %v305 = vadd.f32 %v303, %v304
        %v306 = vrot.slane %v305, 2
        %v307 = vadd.f32 %v305, %v306
        %v308 = vrot.slane %v307, 1
        %v309 = vadd.f32 %v307, %v308
        %v310 = vsub.f32 %v302, %v303
        %v311 = vsub.f32 0.0, %v302
        %v312 = vmul.f32 %v311, 1.442695
        %v313 = vpow.pop %v312
        %v314 = vadd.f32 %v313, 1.0
        %v315 = vlog2.pop %v314
        %v316 = vmul.f32 %v315, 0.6931472
        %v317 = vadd.f32 %v310, %v316
        %v318 = vperm.slane %v120, 0
        %v319 = vmul.f32 %v317, %v318
        %320 = vadd.xlane.f32.xlu0 %v319
        %v321 = vpop.xlane.xlu0 %320
        %v322 = vstv %s154
        %v323 = vmul.f32 %v321, %v322
        %v324 = vmul.f32 %v323, %v159
        %v325 = vsel %vm160, %v324, 0.0
        %326 = vadd.xlane.f32.xlu0 %v325
        %v327 = vpop.xlane.xlu0 %326
        %v328 = vrot.slane %v327, 4
        %v329 = vadd.f32 %v327, %v328
        %v330 = vrot.slane %v329, 2
        %v331 = vadd.f32 %v329, %v330
        %v332 = vrot.slane %v331, 1
        %v333 = vadd.f32 %v331, %v332
        %s334 = vtos %v333
        %s335 = smul.f32 %s334, %s187
        %vm336 = vcmp.gt.f32.partialorder %v302, 0.5
        %v337 = vsel %vm336, 1, 0
        %v338 = vcvt.s32.f32 %v337
        %vm339 = vcmp.eq.f32.partialorder %v338, %v126
        %v340 = vsel %vm339, 1, 0
        %v341 = vcvt.s32.f32 %v340
        %v342 = vmul.f32 %v341, %v318
        %343 = vadd.xlane.f32.xlu0 %v342
        %v344 = vpop.xlane.xlu0 %343
        %s345 = smul.f32 %s154, 100.0
        %v346 = vstv %s345
        %v347 = vmul.f32 %v344, %v346
        %v348 = vmul.f32 %v347, %v159
        %v349 = vsel %vm160, %v348, 0.0
        %350 = vadd.xlane.f32.xlu0 %v349
        %v351 = vpop.xlane.xlu0 %350
        %v352 = vrot.slane %v351, 4
        %v353 = vadd.f32 %v351, %v352
        %v354 = vrot.slane %v353, 2
        %v355 = vadd.f32 %v353, %v354
        %v356 = vrot.slane %v355, 1
        %v357 = vadd.f32 %v355, %v356
        %s358 = vtos %v357
        %s359 = smul.f32 %s358, %s187
        %v360 = vperm.slane %v115, 3
        %361 = vset.pattern.permute.xlu0 3
        %362 = vperm.xlu0 %361, %v224
        %v363 = vpop.permute.xlu0 %362
        %v365 = vsub.f32 %v360, %v363
        %v366 = vmul.f32 %v126, %v365
        %v367 = vmul.f32 %v366, %v365
        %368 = vadd.xlane.f32.xlu0 %v367
        %v369 = vpop.xlane.xlu0 %368
        %v370 = vrot.slane %v369, 4
        %v371 = vadd.f32 %v369, %v370
        %v372 = vrot.slane %v371, 2
        %v373 = vadd.f32 %v371, %v372
        %v374 = vrot.slane %v373, 1
        %v375 = vadd.f32 %v373, %v374
        %s376 = vtos %v375
        %s377 = smul.f32 %s376, %s187
        %v378 = vsub.f32 %v309, %v115
        %v379 = vmul.f32 %v378, %v378
        %v381 = vrot.slane %v120, 1
        %v383 = vmul.f32 %v379, %v381
        %v385 = vrot.slane %v383, 7
        %v387 = vsel %vm127, %v385, 0.0
        %388 = vadd.xlane.f32.xlu0 %v387
        %v389 = vpop.xlane.xlu0 %388
        %v390 = vrot.slane %v389, 4
        %v391 = vadd.f32 %v389, %v390
        %v392 = vrot.slane %v391, 2
        %v393 = vadd.f32 %v391, %v392
        %v394 = vrot.slane %v393, 1
        %v395 = vadd.f32 %v393, %v394
        %s396 = vtos %v395
        %s397 = smul.f32 %s396, %s154
        %vm398 = vcmp.eq.s32.totalorder %v122, 0
        %v399 = vstv %s335
        %v400 = vsel %vm398, %v399, 0.0
        %vm401 = vcmp.eq.s32.totalorder %v122, 1
        %v402 = vstv %s377
        %v403 = vsel %vm401, %v402, %v400
        %vm404 = vcmp.eq.s32.totalorder %v122, 2
        %v405 = vstv %s359
        %v406 = vsel %vm404, %v405, %v403
        %vm407 = vcmp.eq.s32.totalorder %v122, 3
        %v408 = vstv %s397
        %v409 = vsel %vm407, %v408, %v406
        %410 = vst [vmem:[%s109] sm:$0xff] %v409
        %s411 = sand.u32 %s49, 1
        %s412 = scalar_lea.sflag [#allocation3], %s411
        %s413 = sand.u32 %s49, 1
        %s414 = smul.addr %s413, 8
        %s415 = scalar_lea.vmem [#allocation2], %s414
        // Predicated region
        $region25: #{tpu_custom_call.1} parent=23 // pred_check
          %p416 = pneg %p59
        $region26: #{tpu_custom_call.1} parent=23 // pred_check_branch
          %418 = sbr.rel (%p416) target = $region28
        $region27: #{tpu_custom_call.1} parent=23 // pred_region
          %420 = vsyncadd %s412, 0
          %s421 = smul.addr %s15, 8
          %s422 = scalar_lea.hbm %s1, %s421
          %s424 = sshll.u32 %s415, 4
          %s425 = int_to_ptr.vmem [resolvable:$true] %s424
          %s426 = sshll.u32 %s422, 4
          %s427 = int_to_ptr.hbm [resolvable:$true] %s426
          %429 = dma.vmem_to_hbm [thread:$0]  %s425, 128, %s427, %s412
        $region28: #{tpu_custom_call.1} parent=23 // pred_fallthru
          _
      $region24: #{tpu_custom_call.1} parent=5 // pred_fallthru
        _
      %p430 = scmp.le.s32.totalorder 2, %s10
      // Predicated region
      $region29: #{tpu_custom_call.1} parent=5 // pred_check
        %p431 = pneg %p430
      $region30: #{tpu_custom_call.1} parent=5 // pred_check_branch
        %433 = sbr.rel (%p431) target = $region32
      $region31: #{tpu_custom_call.1} parent=5 // pred_region
        %s434 = ssub.s32 %s10, 2
        // Predicated region
        $region33: #{tpu_custom_call.1} parent=31 // pred_check
          %p435 = pneg %p65
        $region34: #{tpu_custom_call.1} parent=31 // pred_check_branch
          %437 = sbr.rel (%p435) target = $region36
        $region35: #{tpu_custom_call.1} parent=31 // pred_region
          %s438 = sand.u32 %s50, 1
          %s439 = scalar_lea.sflag [#allocation3], %s438
          %s440 = sand.u32 %s50, 1
          %s441 = smul.addr %s440, 8
          %s442 = scalar_lea.vmem [#allocation2], %s441
          %444 = dma.done %s439, 128
        $region36: #{tpu_custom_call.1} parent=31 // pred_fallthru
          _
      $region32: #{tpu_custom_call.1} parent=5 // pred_fallthru
        _
    $region6: #{tpu_custom_call.1} parent=1 // loop_footer
      %s14 = sadd.s32 1, %s10
    $region7: #{tpu_custom_call.1} parent=1 // loop_footer_branch
      %9 = sbr.rel target = $region3
    $region8: #{tpu_custom_call.1} parent=1 // loop_exit
      _
    %445 = vsyncpa [#allocation3], 1
    %s446 = scalar_lea.sflag [#allocation3], 1
    %447 = vsyncpa %s446, 1

</llo_original>
